<compile_context>
chip_gen: v7x
topology: tpu7x:2x2x1
jax: 0.10.0
libtpu: 0.0.40
codegen_flags: <defaults>
</compile_context>

<pallas_src>
import jax
import jax.numpy as jnp
from jax.experimental import pallas as pl
from jax.experimental.pallas import tpu as pltpu


def _round_up(x, m):
    return ((x + m - 1) // m) * m


def _linear_weightnorm_kernel(x_ref, w_ref, ws_ref, b_ref, o_ref, acc_ref, ssq_ref):
    """One (i, j, k) grid step.

    x_ref:   (tm, tk)  input tile
    w_ref:   (tn, tk)  raw (un-normalized) weight tile
    ws_ref:  (1,  tn)  weight_scale row
    b_ref:   (1,  tn)  bias row
    o_ref:   (tm, tn)  output tile (written only at k == last)
    acc_ref: (tm, tn)  f32 matmul accumulator (scratch)
    ssq_ref: (8,  tn)  f32 per-output-row sum(w^2) accumulator (scratch,
                       8 identical rows to keep the layout MXU/vreg friendly)
    """
    k = pl.program_id(2)

    @pl.when(k == 0)
    def _():
        acc_ref[...] = jnp.zeros_like(acc_ref)
        ssq_ref[...] = jnp.zeros_like(ssq_ref)

    x = x_ref[...]
    w = w_ref[...]

    # y_tile += x @ w.T  -- contract both operands on K, no transposed copy.
    acc_ref[...] += jax.lax.dot_general(
        x, w,
        dimension_numbers=(((1,), (1,)), ((), ())),
        preferred_element_type=jnp.float32)

    # Accumulate per-output-row sum of squares of the raw weight tile (f32).
    # Done as a tiny (8,tk)x(tk,tn) MXU op so the result lands lane-dense as
    # rows of shape (tn,) -- avoids a cross-lane reduce + relayout on the VPU/XLU.
    wf = w.astype(jnp.float32)
    ones = jnp.ones((8, wf.shape[1]), jnp.float32)
    ssq_ref[...] += jax.lax.dot_general(
        ones, wf * wf,
        dimension_numbers=(((1,), (1,)), ((), ())),
        preferred_element_type=jnp.float32)

    @pl.when(k == pl.num_programs(2) - 1)
    def _():
        ssq = ssq_ref[0:1, :]                                   # (1, tn)
        inv_norm = jax.lax.rsqrt(ssq)                           # 1/||w_row||
        scale = ws_ref[...].astype(jnp.float32) * inv_norm      # (1, tn)
        y = acc_ref[...] * scale + b_ref[...].astype(jnp.float32)
        o_ref[...] = y.astype(o_ref.dtype)


def linear_weight_norm(x, weight, weight_scale=1.0, bias=None,
                       *, tm=256, tn=256, tk=512):
    """LinearWeightNorm forward.

    x: (..., K); weight: (N, K); weight_scale: scalar or (N,)/(N,1)/(1,N);
    bias: (N,) or None.  Returns (..., N) in x.dtype.
    """
    out_dtype = x.dtype
    *lead, K = x.shape
    N, K_w = weight.shape
    assert K == K_w, "x / weight in_features mismatch"

    x2 = x.reshape(-1, K)
    B = x2.shape[0]

    # Fold weight_scale / bias into lane-dense (1, N) rows.
    ws = jnp.asarray(weight_scale, dtype=jnp.float32)
    if ws.ndim == 0:
        ws_row = jnp.full((1, N), ws, dtype=jnp.float32)
    else:
        ws_row = ws.reshape(1, N).astype(jnp.float32)
    if bias is None:
        b_row = jnp.zeros((1, N), jnp.float32)
    else:
        b_row = jnp.asarray(bias).reshape(1, N).astype(jnp.float32)

    # Clamp tiles to the (padded) problem, keeping (8, 128) alignment.
    tm = min(tm, _round_up(B, 8))
    tn = min(tn, _round_up(N, 128))
    tk = min(tk, _round_up(K, 128))

    Bp, Np, Kp = _round_up(B, tm), _round_up(N, tn), _round_up(K, tk)
    if (Bp, Kp) != (B, K):
        x2 = jnp.pad(x2, ((0, Bp - B), (0, Kp - K)))
    w_p = weight
    if (Np, Kp) != (N, K):
        w_p = jnp.pad(weight, ((0, Np - N), (0, Kp - K)))
    if Np != N:
        # Padded weight rows are all-zero -> their output columns are junk
        # (rsqrt(0)), but they are sliced off below.
        ws_row = jnp.pad(ws_row, ((0, 0), (0, Np - N)))
        b_row = jnp.pad(b_row, ((0, 0), (0, Np - N)))

    grid = (Bp // tm, Np // tn, Kp // tk)

    out = pl.pallas_call(
        _linear_weightnorm_kernel,
        out_shape=jax.ShapeDtypeStruct((Bp, Np), out_dtype),
        grid_spec=pltpu.PrefetchScalarGridSpec(
            num_scalar_prefetch=0,
            grid=grid,
            in_specs=[
                pl.BlockSpec((tm, tk), lambda i, j, k: (i, k)),   # x
                pl.BlockSpec((tn, tk), lambda i, j, k: (j, k)),   # weight
                pl.BlockSpec((1, tn), lambda i, j, k: (0, j)),    # weight_scale
                pl.BlockSpec((1, tn), lambda i, j, k: (0, j)),    # bias
            ],
            out_specs=pl.BlockSpec((tm, tn), lambda i, j, k: (i, j)),
            scratch_shapes=[
                pltpu.VMEM((tm, tn), jnp.float32),   # matmul accumulator
                pltpu.VMEM((8, tn), jnp.float32),    # sum(w^2) accumulator
            ],
        ),
        compiler_params=pltpu.CompilerParams(
            dimension_semantics=("parallel", "parallel", "arbitrary"),
            vmem_limit_bytes=32 * 1024 * 1024,
        ),
    )(x2, w_p, ws_row, b_row)

    out = out[:B, :N]
    return out.reshape(*lead, N)


if __name__ == "__main__":
    key = jax.random.PRNGKey(0)
    k_x, k_w, k_b = jax.random.split(key, 3)

    # Small but multi-tile shapes (deliberately not tile-aligned -> exercises
    # padding, the K-loop accumulator, and the finalize epilogue).
    batch = 20
    in_features = 300
    out_features = 200
    weight_init_stdv = 0.1
    weight_scale_int = 2   # module path: Parameter(torch.ones(N,1) * weight_scale)

    weight = (jax.random.normal(k_w, (out_features, in_features), jnp.float32)
              * weight_init_stdv)
    weight_scale = jnp.ones((out_features, 1), jnp.float32) * weight_scale_int
    # Module init uses zeros for bias; use a nonzero bias here so the bias
    # path is actually exercised by the check.
    bias = 0.1 * jax.random.normal(k_b, (out_features,), jnp.float32)

    x = jax.random.normal(k_x, (batch, in_features), jnp.float32)

    # Small tiles for the test so the grid is (2, 2, 3).
    y = linear_weight_norm(x, weight, weight_scale, bias, tm=16, tn=128, tk=128)
    y = jax.block_until_ready(y)

    # Pure-JAX reference (original module math).
    W_ref = weight * weight_scale / jnp.sqrt(jnp.sum(weight ** 2, axis=1, keepdims=True))
    y_ref = x @ W_ref.T + bias

    assert y.shape == y_ref.shape and y.dtype == y_ref.dtype
    # Tolerance accounts for MXU default-precision matmul + tiled K accumulation
    # and post-matmul column scaling vs. the reference's pre-scaled weights.
    max_err = float(jnp.max(jnp.abs(y - y_ref)))
    assert jnp.allclose(y, y_ref, atol=1e-2, rtol=1e-2), f"mismatch, max_err={max_err}"

    print("KERNEL_OK")
</pallas_src>

<mosaic_0001>
module attributes {stable_mosaic.version = 11 : i64} {
  func.func @_linear_weightnorm_kernel(%arg0: i32, %arg1: i32, %arg2: i32, %arg3: memref<16x128xf32, #tpu.memory_space<vmem>>, %arg4: memref<128x128xf32, #tpu.memory_space<vmem>>, %arg5: memref<1x128xf32, #tpu.memory_space<vmem>>, %arg6: memref<1x128xf32, #tpu.memory_space<vmem>>, %arg7: memref<16x128xf32, #tpu.memory_space<vmem>>, %arg8: memref<16x128xf32, #tpu.memory_space<vmem>>, %arg9: memref<8x128xf32, #tpu.memory_space<vmem>>) attributes {dimension_semantics = [#tpu.dimension_semantics<parallel>, #tpu.dimension_semantics<parallel>, #tpu.dimension_semantics<arbitrary>], iteration_bounds = array<i64: 2, 2, 3>, scalar_prefetch = 0 : i64, scratch_operands = 2 : i64, tpu.core_type = #tpu.core_type<tc>, window_params = [{transform_indices = @transform_0, window_bounds = array<i64: 16, 128>}, {transform_indices = @transform_1, window_bounds = array<i64: 128, 128>}, {transform_indices = @transform_2, window_bounds = array<i64: 1, 128>}, {transform_indices = @transform_3, window_bounds = array<i64: 1, 128>}, {transform_indices = @transform_4, window_bounds = array<i64: 16, 128>}]} {
    %c0_i32 = arith.constant 0 : i32
    %0 = arith.cmpi eq, %arg2, %c0_i32 : i32
    %1 = arith.extui %0 : i1 to i32
    %c0_i32_0 = arith.constant 0 : i32
    %2 = arith.cmpi ne, %1, %c0_i32_0 : i32
    scf.if %2 {
      %cst_15 = arith.constant 0.000000e+00 : f32
      %18 = vector.broadcast %cst_15 : f32 to vector<16x128xf32>
      %c0_16 = arith.constant 0 : index
      %c0_17 = arith.constant 0 : index
      %19 = vector.load %arg8[%c0_16, %c0_17] : memref<16x128xf32, #tpu.memory_space<vmem>>, vector<16x128xf32>
      tpu.vector_store %arg8[%c0_16, %c0_17], %18 {strides = array<i32>} : memref<16x128xf32, #tpu.memory_space<vmem>>, vector<16x128xf32>,
      %cst_18 = arith.constant 0.000000e+00 : f32
      %20 = vector.broadcast %cst_18 : f32 to vector<8x128xf32>
      %c0_19 = arith.constant 0 : index
      %c0_20 = arith.constant 0 : index
      %21 = vector.load %arg9[%c0_19, %c0_20] : memref<8x128xf32, #tpu.memory_space<vmem>>, vector<8x128xf32>
      tpu.vector_store %arg9[%c0_19, %c0_20], %20 {strides = array<i32>} : memref<8x128xf32, #tpu.memory_space<vmem>>, vector<8x128xf32>,
    } else {
    }
    %c0 = arith.constant 0 : index
    %c0_1 = arith.constant 0 : index
    %3 = vector.load %arg3[%c0, %c0_1] : memref<16x128xf32, #tpu.memory_space<vmem>>, vector<16x128xf32>
    %c0_2 = arith.constant 0 : index
    %c0_3 = arith.constant 0 : index
    %4 = vector.load %arg4[%c0_2, %c0_3] : memref<128x128xf32, #tpu.memory_space<vmem>>, vector<128x128xf32>
    %c0_4 = arith.constant 0 : index
    %c0_5 = arith.constant 0 : index
    %5 = vector.load %arg8[%c0_4, %c0_5] : memref<16x128xf32, #tpu.memory_space<vmem>>, vector<16x128xf32>
    %cst = arith.constant dense<0.000000e+00> : vector<16x128xf32>
    %6 = tpu.matmul %3, %4, %cst {dimension_numbers = #tpu.dot_dimension_numbers<[1], [1], [0], [0], [0, 0, 1, 0], [], []>} : vector<16x128xf32>, vector<128x128xf32>, vector<16x128xf32> -> vector<16x128xf32>
    %7 = arith.addf %5, %6 : vector<16x128xf32>
    %c0_6 = arith.constant 0 : index
    %c0_7 = arith.constant 0 : index
    %8 = vector.load %arg8[%c0_6, %c0_7] : memref<16x128xf32, #tpu.memory_space<vmem>>, vector<16x128xf32>
    tpu.vector_store %arg8[%c0_6, %c0_7], %7 {strides = array<i32>} : memref<16x128xf32, #tpu.memory_space<vmem>>, vector<16x128xf32>,
    %cst_8 = arith.constant 1.000000e+00 : f32
    %9 = vector.broadcast %cst_8 : f32 to vector<8x128xf32>
    %c0_9 = arith.constant 0 : index
    %c0_10 = arith.constant 0 : index
    %10 = vector.load %arg9[%c0_9, %c0_10] : memref<8x128xf32, #tpu.memory_space<vmem>>, vector<8x128xf32>
    %11 = arith.mulf %4, %4 : vector<128x128xf32>
    %cst_11 = arith.constant dense<0.000000e+00> : vector<8x128xf32>
    %12 = tpu.matmul %9, %11, %cst_11 {dimension_numbers = #tpu.dot_dimension_numbers<[1], [1], [0], [0], [0, 0, 1, 0], [], []>} : vector<8x128xf32>, vector<128x128xf32>, vector<8x128xf32> -> vector<8x128xf32>
    %13 = arith.addf %10, %12 : vector<8x128xf32>
    %c0_12 = arith.constant 0 : index
    %c0_13 = arith.constant 0 : index
    %14 = vector.load %arg9[%c0_12, %c0_13] : memref<8x128xf32, #tpu.memory_space<vmem>>, vector<8x128xf32>
    tpu.vector_store %arg9[%c0_12, %c0_13], %13 {strides = array<i32>} : memref<8x128xf32, #tpu.memory_space<vmem>>, vector<8x128xf32>,
    %c2_i32 = arith.constant 2 : i32
    %15 = arith.cmpi eq, %arg2, %c2_i32 : i32
    %16 = arith.extui %15 : i1 to i32
    %c0_i32_14 = arith.constant 0 : i32
    %17 = arith.cmpi ne, %16, %c0_i32_14 : i32
    scf.if %17 {
      %c0_15 = arith.constant 0 : index
      %c0_16 = arith.constant 0 : index
      %18 = vector.load %arg9[%c0_15, %c0_16] : memref<8x128xf32, #tpu.memory_space<vmem>>, vector<1x128xf32>
      %19 = math.rsqrt %18 : vector<1x128xf32>
      %c0_17 = arith.constant 0 : index
      %c0_18 = arith.constant 0 : index
      %20 = vector.load %arg5[%c0_17, %c0_18] : memref<1x128xf32, #tpu.memory_space<vmem>>, vector<1x128xf32>
      %21 = arith.mulf %20, %19 : vector<1x128xf32>
      %c0_19 = arith.constant 0 : index
      %c0_20 = arith.constant 0 : index
      %22 = vector.load %arg8[%c0_19, %c0_20] : memref<16x128xf32, #tpu.memory_space<vmem>>, vector<16x128xf32>
      %23 = vector.broadcast %21 : vector<1x128xf32> to vector<16x128xf32>
      %24 = arith.mulf %22, %23 : vector<16x128xf32>
      %c0_21 = arith.constant 0 : index
      %c0_22 = arith.constant 0 : index
      %25 = vector.load %arg6[%c0_21, %c0_22] : memref<1x128xf32, #tpu.memory_space<vmem>>, vector<1x128xf32>
      %26 = vector.broadcast %25 : vector<1x128xf32> to vector<16x128xf32>
      %27 = arith.addf %24, %26 : vector<16x128xf32>
      %c0_23 = arith.constant 0 : index
      %c0_24 = arith.constant 0 : index
      %28 = vector.load %arg7[%c0_23, %c0_24] : memref<16x128xf32, #tpu.memory_space<vmem>>, vector<16x128xf32>
      tpu.vector_store %arg7[%c0_23, %c0_24], %27 {strides = array<i32>} : memref<16x128xf32, #tpu.memory_space<vmem>>, vector<16x128xf32>,
    } else {
    }
    return
  }
  func.func @transform_0(%arg0: i32, %arg1: i32, %arg2: i32) -> (i32, i32) {
    %c0_i32 = arith.constant 0 : i32
    return %arg0, %arg2 : i32, i32
  }
  func.func @transform_1(%arg0: i32, %arg1: i32, %arg2: i32) -> (i32, i32) {
    %c0_i32 = arith.constant 0 : i32
    return %arg1, %arg2 : i32, i32
  }
  func.func @transform_2(%arg0: i32, %arg1: i32, %arg2: i32) -> (i32, i32) {
    %c0_i32 = arith.constant 0 : i32
    %c0_i32_0 = arith.constant 0 : i32
    return %c0_i32, %arg1 : i32, i32
  }
  func.func @transform_3(%arg0: i32, %arg1: i32, %arg2: i32) -> (i32, i32) {
    %c0_i32 = arith.constant 0 : i32
    %c0_i32_0 = arith.constant 0 : i32
    return %c0_i32, %arg1 : i32, i32
  }
  func.func @transform_4(%arg0: i32, %arg1: i32, %arg2: i32) -> (i32, i32) {
    %c0_i32 = arith.constant 0 : i32
    return %arg0, %arg1 : i32, i32
  }
}

</mosaic_0001>

<llo_original>
// kernel: tpu_custom_call.1
$region0: #{tpu_custom_call.1}
  #allocation0 [shape = 'u32[]', space=smem, size = 0x4, offset = 0x4, fixed_abs, tag = 'smem constant byte address 0x4 - core index']
  #allocation1 [shape = 'u32[144,128]{1,0:T(1,128)}', space=vmem, size = 0x12000, scoped, tag = 'internal scratch']
  #allocation2 [shape = 'f32[16,128]{1,0:T(8,128)}', space=vmem, size = 0x2000, scoped, tag = 'scratch operand']
  #allocation3 [shape = 'f32[8,128]{1,0:T(8,128)}', space=vmem, size = 0x1000, scoped, tag = 'scratch operand']
  %s0 = inlined_call_operand.hbm [shape: f32[32,384], index: 0, kind: input, shape index: {}]
  %s1 = inlined_call_operand.hbm [shape: f32[256,384], index: 1, kind: input, shape index: {}]
  %s2 = inlined_call_operand.vmem [shape: f32[1,256], index: 2, kind: input, shape index: {}]
  %s3 = inlined_call_operand.vmem [shape: f32[1,256], index: 3, kind: input, shape index: {}]
  %s4 = inlined_call_operand.hbm [shape: f32[32,256], index: 4, kind: output, shape index: {}]
  %s5 = sld [smem:[#allocation0]]
  $region65: #{tpu_custom_call.1} parent=0
    _
  %s7 = ssub.s32 1, %s5
  %s8 = scalar_select 0, %s7, %s5
  $region1: #{tpu_custom_call.1} parent=0
    #allocation4 [shape = 'u8[16384]{0}', space=vmem, size = 0x4000, scoped, tag = 'input window, operand 0']
    #allocation5 [shape = 's32[2]{0}', space=sflag, size = 0x8, scoped, tag = 'scoped memory for tpu_custom_call.1']
    #allocation6 [shape = 's32[2]{0}', space=sflag, size = 0x8, scoped, tag = 'scoped memory for tpu_custom_call.1']
    #allocation7 [shape = 'u8[131072]{0}', space=vmem, size = 0x20000, scoped, tag = 'input window, operand 1']
    #allocation8 [shape = 's32[2]{0}', space=sflag, size = 0x8, scoped, tag = 'scoped memory for tpu_custom_call.1']
    #allocation9 [shape = 'u8[16384]{0}', space=vmem, size = 0x4000, scoped, tag = 'output window, operand 0']
    %9 = vsyncpa [#allocation5], 0
    %s10 = scalar_lea.sflag [#allocation5], 1
    %11 = vsyncpa %s10, 0
    %12 = vsyncpa [#allocation8], 0
    %s13 = scalar_lea.sflag [#allocation8], 1
    %14 = vsyncpa %s13, 0
    %15 = vsyncpa [#allocation6], 0
    %s16 = scalar_lea.sflag [#allocation6], 1
    %17 = vsyncpa %s16, 0
    loop: start=0, step=1, limit=14
    $region2: #{tpu_custom_call.1} parent=1 // loop_pre_header
      _
    $region3: #{tpu_custom_call.1} parent=1 // loop_header
      %s19 = sphi 0, %s23
      %p20 = scmp.ge.s32.totalorder %s19, 14
      %s26 = sphi 0, %s45
      %s27 = sphi 0, %s41
      %s28 = sphi 0, %s37
      %s29 = sphi 0, %s26
      %s30 = sphi 0, %s27
      %s31 = sphi 0, %s28
      %s32 = sphi 0, %s29
      %s33 = sphi 0, %s30
      %s34 = sphi 0, %s31
      %s50 = sphi 0, %s52
      %s53 = sphi 0, %s50
      %s54 = sphi 0, %s53
      %s70 = sphi 0, %s54
      %s78 = sphi 0, %s80
      %s81 = sphi 0, %s78
      %s82 = sphi 0, %s81
      %s98 = sphi 0, %s82
      %s104 = sphi 0, %s106
      %s107 = sphi 0, %s104
      %s108 = sphi 0, %s107
      %s124 = sphi 0, %s108
      %s130 = sphi 0, %s132
      %s133 = sphi 0, %s130
      %s134 = sphi 0, %s133
      %s150 = sphi 0, %s134
      %s158 = sphi 0, %s160
      %s161 = sphi 0, %s158
      %s162 = sphi 0, %s161
      %s178 = sphi 0, %s162
    $region4: #{tpu_custom_call.1} parent=1 // loop_header_branch
      %22 = sbr.rel (%p20) target = $region8
    $region5: #{tpu_custom_call.1} parent=1 // loop_body
      %s24 = ssub.s32 %s19, 1
      %s25 = ssub.s32 %s19, 2
      %s35 = sadd.s32 1, %s28
      %p36 = scmp.ge.s32.totalorder %s35, 3
      %s37 = scalar_select %p36, 0, %s35
      %s38 = sadd.s32 1, %s27
      %s39 = scalar_select %p36, %s38, %s27
      %p40 = scmp.ge.s32.totalorder %s39, 2
      %s41 = scalar_select %p40, 0, %s39
      %s42 = sadd.s32 1, %s26
      %s43 = scalar_select %p40, %s42, %s26
      %p44 = scmp.ge.s32.totalorder %s43, 2
      %s45 = scalar_select %p44, 0, %s43
      %s46 = ssub.s32 %s26, %s45
      %s47 = ssub.s32 %s28, %s37
      %s48 = sor.u32 %s46, %s47
      %p49 = scmp.eq.s32.totalorder %s48, 0
      %s51 = sadd.s32 %s50, 1
      %s52 = scalar_select %p49, %s50, %s51
      %p55 = pneg %p49
      %p56 = scmp.eq.s32.totalorder %s19, 11
      %p57 = por %p55, %p56
      %p58 = scmp.ne.s32.totalorder %s50, %s53
      %p59 = scmp.eq.s32.totalorder %s19, 0
      %p60 = por %p58, %p59
      %p61 = scmp.ne.s32.totalorder %s50, %s53
      %p62 = scmp.eq.s32.totalorder %s24, 11
      %p63 = por %p61, %p62
      %p64 = scmp.ne.s32.totalorder %s53, %s54
      %p65 = scmp.eq.s32.totalorder %s24, 0
      %p66 = por %p64, %p65
      %p67 = scmp.ne.s32.totalorder %s53, %s54
      %p68 = scmp.eq.s32.totalorder %s25, 11
      %p69 = por %p67, %p68
      %p71 = scmp.ne.s32.totalorder %s54, %s70
      %p72 = scmp.eq.s32.totalorder %s25, 0
      %p73 = por %p71, %p72
      %s74 = ssub.s32 %s27, %s41
      %s75 = ssub.s32 %s28, %s37
      %s76 = sor.u32 %s74, %s75
      %p77 = scmp.eq.s32.totalorder %s76, 0
      %s79 = sadd.s32 %s78, 1
      %s80 = scalar_select %p77, %s78, %s79
      %p83 = pneg %p77
      %p84 = scmp.eq.s32.totalorder %s19, 11
      %p85 = por %p83, %p84
      %p86 = scmp.ne.s32.totalorder %s78, %s81
      %p87 = scmp.eq.s32.totalorder %s19, 0
      %p88 = por %p86, %p87
      %p89 = scmp.ne.s32.totalorder %s78, %s81
      %p90 = scmp.eq.s32.totalorder %s24, 11
      %p91 = por %p89, %p90
      %p92 = scmp.ne.s32.totalorder %s81, %s82
      %p93 = scmp.eq.s32.totalorder %s24, 0
      %p94 = por %p92, %p93
      %p95 = scmp.ne.s32.totalorder %s81, %s82
      %p96 = scmp.eq.s32.totalorder %s25, 11
      %p97 = por %p95, %p96
      %p99 = scmp.ne.s32.totalorder %s82, %s98
      %p100 = scmp.eq.s32.totalorder %s25, 0
      %p101 = por %p99, %p100
      %s102 = ssub.s32 %s27, %s41
      %p103 = scmp.eq.s32.totalorder %s102, 0
      %s105 = sadd.s32 %s104, 1
      %s106 = scalar_select %p103, %s104, %s105
      %p109 = pneg %p103
      %p110 = scmp.eq.s32.totalorder %s19, 11
      %p111 = por %p109, %p110
      %p112 = scmp.ne.s32.totalorder %s104, %s107
      %p113 = scmp.eq.s32.totalorder %s19, 0
      %p114 = por %p112, %p113
      %p115 = scmp.ne.s32.totalorder %s104, %s107
      %p116 = scmp.eq.s32.totalorder %s24, 11
      %p117 = por %p115, %p116
      %p118 = scmp.ne.s32.totalorder %s107, %s108
      %p119 = scmp.eq.s32.totalorder %s24, 0
      %p120 = por %p118, %p119
      %p121 = scmp.ne.s32.totalorder %s107, %s108
      %p122 = scmp.eq.s32.totalorder %s25, 11
      %p123 = por %p121, %p122
      %p125 = scmp.ne.s32.totalorder %s108, %s124
      %p126 = scmp.eq.s32.totalorder %s25, 0
      %p127 = por %p125, %p126
      %s128 = ssub.s32 %s27, %s41
      %p129 = scmp.eq.s32.totalorder %s128, 0
      %s131 = sadd.s32 %s130, 1
      %s132 = scalar_select %p129, %s130, %s131
      %p135 = pneg %p129
      %p136 = scmp.eq.s32.totalorder %s19, 11
      %p137 = por %p135, %p136
      %p138 = scmp.ne.s32.totalorder %s130, %s133
      %p139 = scmp.eq.s32.totalorder %s19, 0
      %p140 = por %p138, %p139
      %p141 = scmp.ne.s32.totalorder %s130, %s133
      %p142 = scmp.eq.s32.totalorder %s24, 11
      %p143 = por %p141, %p142
      %p144 = scmp.ne.s32.totalorder %s133, %s134
      %p145 = scmp.eq.s32.totalorder %s24, 0
      %p146 = por %p144, %p145
      %p147 = scmp.ne.s32.totalorder %s133, %s134
      %p148 = scmp.eq.s32.totalorder %s25, 11
      %p149 = por %p147, %p148
      %p151 = scmp.ne.s32.totalorder %s134, %s150
      %p152 = scmp.eq.s32.totalorder %s25, 0
      %p153 = por %p151, %p152
      %s154 = ssub.s32 %s26, %s45
      %s155 = ssub.s32 %s27, %s41
      %s156 = sor.u32 %s154, %s155
      %p157 = scmp.eq.s32.totalorder %s156, 0
      %s159 = sadd.s32 %s158, 1
      %s160 = scalar_select %p157, %s158, %s159
      %p163 = pneg %p157
      %p164 = scmp.eq.s32.totalorder %s19, 11
      %p165 = por %p163, %p164
      %p166 = scmp.ne.s32.totalorder %s158, %s161
      %p167 = scmp.eq.s32.totalorder %s19, 0
      %p168 = por %p166, %p167
      %p169 = scmp.ne.s32.totalorder %s158, %s161
      %p170 = scmp.eq.s32.totalorder %s24, 11
      %p171 = por %p169, %p170
      %p172 = scmp.ne.s32.totalorder %s161, %s162
      %p173 = scmp.eq.s32.totalorder %s24, 0
      %p174 = por %p172, %p173
      %p175 = scmp.ne.s32.totalorder %s161, %s162
      %p176 = scmp.eq.s32.totalorder %s25, 11
      %p177 = por %p175, %p176
      %p179 = scmp.ne.s32.totalorder %s162, %s178
      %p180 = scmp.eq.s32.totalorder %s25, 0
      %p181 = por %p179, %p180
      %p182 = scmp.le.s32.totalorder 1, %s19
      %p183 = scmp.lt.s32.totalorder %s19, 13
      %p184 = pnand %p182, %p183
      %p185 = pneg %p184
      // Predicated region
      $region9: #{tpu_custom_call.1} parent=5 // pred_check
        _
      $region10: #{tpu_custom_call.1} parent=5 // pred_check_branch
        %187 = sbr.rel (%p184) target = $region12
      $region11: #{tpu_custom_call.1} parent=5 // pred_region
        %s188 = ssub.s32 %s19, 1
      $region12: #{tpu_custom_call.1} parent=5 // pred_fallthru
        _
      %p189 = scmp.lt.s32.totalorder %s19, 12
      // Predicated region
      $region13: #{tpu_custom_call.1} parent=5 // pred_check
        %p190 = pneg %p189
      $region14: #{tpu_custom_call.1} parent=5 // pred_check_branch
        %192 = sbr.rel (%p190) target = $region16
      $region15: #{tpu_custom_call.1} parent=5 // pred_region
        // Predicated region
        $region17: #{tpu_custom_call.1} parent=15 // pred_check
          %p193 = pneg %p60
        $region18: #{tpu_custom_call.1} parent=15 // pred_check_branch
          %195 = sbr.rel (%p193) target = $region20
        $region19: #{tpu_custom_call.1} parent=15 // pred_region
          %s196 = sand.u32 %s50, 1
          %s197 = scalar_lea.sflag [#allocation5], %s196
          %s198 = sand.u32 %s50, 1
          %s199 = smul.addr %s198, 16
          %s200 = scalar_lea.vmem [#allocation4], %s199
          %s201 = smul.u32 2, %s26
          %s203 = ssub.s32 256, 256
          %204 = vsyncadd %s197, %s203
          %s205 = smul.addr %s201, 3
          %s206 = sadd.s32 %s28, %s205
          %s207 = smul.addr %s206, 128
          %s208 = scalar_lea.hbm %s0, %s207
          %s209 = sshll.u32 %s200, 4
          %s210 = int_to_ptr.vmem [resolvable:$true] %s209
          %215 = dma.hbm_to_vmem [thread:$0]  %s208, 256, %s210, %s197, 384, 128, 8
        $region20: #{tpu_custom_call.1} parent=15 // pred_fallthru
          _
        // Predicated region
        $region21: #{tpu_custom_call.1} parent=15 // pred_check
          %p216 = pneg %p88
        $region22: #{tpu_custom_call.1} parent=15 // pred_check_branch
          %218 = sbr.rel (%p216) target = $region24
        $region23: #{tpu_custom_call.1} parent=15 // pred_region
          %s219 = sand.u32 %s78, 1
          %s220 = scalar_lea.sflag [#allocation8], %s219
          %s221 = sand.u32 %s78, 1
          %s222 = smul.addr %s221, 128
          %s223 = scalar_lea.vmem [#allocation7], %s222
          %s224 = smul.u32 16, %s27
          %s226 = ssub.s32 2048, 2048
          %227 = vsyncadd %s220, %s226
          %s228 = smul.addr %s224, 3
          %s229 = sadd.s32 %s28, %s228
          %s230 = smul.addr %s229, 128
          %s231 = scalar_lea.hbm %s1, %s230
          %s232 = sshll.u32 %s223, 4
          %s233 = int_to_ptr.vmem [resolvable:$true] %s232
          %238 = dma.hbm_to_vmem [thread:$0]  %s231, 2048, %s233, %s220, 384, 128, 8
        $region24: #{tpu_custom_call.1} parent=15 // pred_fallthru
          _
        // Predicated region
        $region25: #{tpu_custom_call.1} parent=15 // pred_check
          %p239 = pneg %p114
        $region26: #{tpu_custom_call.1} parent=15 // pred_check_branch
          %241 = sbr.rel (%p239) target = $region28
        $region27: #{tpu_custom_call.1} parent=15 // pred_region
          %p242 = scmp.lt.s32.totalorder %s27, 1
          %s243 = scalar_select %p242, %s27, 1
          %s244 = scalar_lea.vmem %s2, %s243
        $region28: #{tpu_custom_call.1} parent=15 // pred_fallthru
          _
        // Predicated region
        $region29: #{tpu_custom_call.1} parent=15 // pred_check
          %p245 = pneg %p140
        $region30: #{tpu_custom_call.1} parent=15 // pred_check_branch
          %247 = sbr.rel (%p245) target = $region32
        $region31: #{tpu_custom_call.1} parent=15 // pred_region
          %p248 = scmp.lt.s32.totalorder %s27, 1
          %s249 = scalar_select %p248, %s27, 1
          %s250 = scalar_lea.vmem %s3, %s249
        $region32: #{tpu_custom_call.1} parent=15 // pred_fallthru
          _
      $region16: #{tpu_custom_call.1} parent=5 // pred_fallthru
        _
      %p251 = scmp.le.s32.totalorder 1, %s19
      %p252 = scmp.lt.s32.totalorder %s19, 13
      %p253 = pnand %p251, %p252
      %p254 = pneg %p253
      // Predicated region
      $region33: #{tpu_custom_call.1} parent=5 // pred_check
        _
      $region34: #{tpu_custom_call.1} parent=5 // pred_check_branch
        %256 = sbr.rel (%p253) target = $region36
      $region35: #{tpu_custom_call.1} parent=5 // pred_region
        %s257 = ssub.s32 %s19, 1
        %s258 = sand.u32 %s53, 1
        %s259 = scalar_lea.sflag [#allocation5], %s258
        %s260 = sand.u32 %s53, 1
        %s261 = smul.addr %s260, 16
        %s262 = scalar_lea.vmem [#allocation4], %s261
        // Predicated region
        $region37: #{tpu_custom_call.1} parent=35 // pred_check
          %p263 = pneg %p66
        $region38: #{tpu_custom_call.1} parent=35 // pred_check_branch
          %265 = sbr.rel (%p263) target = $region40
        $region39: #{tpu_custom_call.1} parent=35 // pred_region
          %266 = dma.done %s259, 256
        $region40: #{tpu_custom_call.1} parent=35 // pred_fallthru
          _
        %s267 = sand.u32 %s81, 1
        %s268 = scalar_lea.sflag [#allocation8], %s267
        %s269 = sand.u32 %s81, 1
        %s270 = smul.addr %s269, 128
        %s271 = scalar_lea.vmem [#allocation7], %s270
        // Predicated region
        $region41: #{tpu_custom_call.1} parent=35 // pred_check
          %p272 = pneg %p94
        $region42: #{tpu_custom_call.1} parent=35 // pred_check_branch
          %274 = sbr.rel (%p272) target = $region44
        $region43: #{tpu_custom_call.1} parent=35 // pred_region
          %275 = dma.done %s268, 2048
        $region44: #{tpu_custom_call.1} parent=35 // pred_fallthru
          _
        %s276 = sand.u32 %s53, 1
        %s277 = scalar_lea.sflag [#allocation5], %s276
        %s278 = sand.u32 %s53, 1
        %s279 = smul.addr %s278, 16
        %s280 = scalar_lea.vmem [#allocation4], %s279
        %p281 = pneg %p66
        %p282 = pneg %p63
        %s283 = sand.u32 %s81, 1
        %s284 = scalar_lea.sflag [#allocation8], %s283
        %s285 = sand.u32 %s81, 1
        %s286 = smul.addr %s285, 128
        %s287 = scalar_lea.vmem [#allocation7], %s286
        %p288 = pneg %p94
        %p289 = pneg %p91
        %p290 = scmp.lt.s32.totalorder %s30, 1
        %s291 = scalar_select %p290, %s30, 1
        %s292 = scalar_lea.vmem %s2, %s291
        %p293 = pneg %p120
        %p294 = pneg %p117
        %p295 = scmp.lt.s32.totalorder %s30, 1
        %s296 = scalar_select %p295, %s30, 1
        %s297 = scalar_lea.vmem %s3, %s296
        %p298 = pneg %p146
        %p299 = pneg %p143
        %p300 = pneg %p174
        %p301 = pneg %p171
        %s302 = sand.u32 %s161, 1
        %s303 = scalar_lea.sflag [#allocation6], %s302
        %s304 = sand.u32 %s161, 1
        %s305 = smul.addr %s304, 16
        %s306 = scalar_lea.vmem [#allocation9], %s305
        %s307 = smul.u32 2, %s29
        %s308 = smul.u32 16, %s30
        %p309 = scmp.lt.s32.totalorder %s30, 1
        %s310 = scalar_select %p309, %s30, 1
        %s311 = scalar_lea.vmem %s2, %s310
        %p312 = scmp.lt.s32.totalorder %s30, 1
        %s313 = scalar_select %p312, %s30, 1
        %s314 = scalar_lea.vmem %s3, %s313
        %s315 = smul.u32 2, %s29
        %p316 = scmp.eq.s32.totalorder %s31, 0
        // Predicated region
        $region45: #{tpu_custom_call.1} parent=35 // pred_check
          %p317 = pneg %p316
        $region46: #{tpu_custom_call.1} parent=35 // pred_check_branch
          %319 = sbr.rel (%p317) target = $region48
        $region47: #{tpu_custom_call.1} parent=35 // pred_region
          %320 = vst [vmem:[#allocation2] sm:$0xff] 0.0
          %321 = vst [vmem:[#allocation2 + $0x8] sm:$0xff] 0.0
          %322 = vst [vmem:[#allocation3] sm:$0xff] 0.0
        $region48: #{tpu_custom_call.1} parent=35 // pred_fallthru
          _
        %v323 = vld [vmem:[%s262] sm:$0xff]
        %v324 = vld [vmem:[%s262 + $0x8] sm:$0xff]
        %v325 = vld [vmem:[%s271] sm:$0xff]
        %v326 = vld [vmem:[%s271 + $0x8] sm:$0xff]
        %v327 = vld [vmem:[%s271 + $0x10] sm:$0xff]
        %v328 = vld [vmem:[%s271 + $0x18] sm:$0xff]
        %v329 = vld [vmem:[%s271 + $0x20] sm:$0xff]
        %v330 = vld [vmem:[%s271 + $0x28] sm:$0xff]
        %v331 = vld [vmem:[%s271 + $0x30] sm:$0xff]
        %v332 = vld [vmem:[%s271 + $0x38] sm:$0xff]
        %v333 = vld [vmem:[%s271 + $0x40] sm:$0xff]
        %v334 = vld [vmem:[%s271 + $0x48] sm:$0xff]
        %v335 = vld [vmem:[%s271 + $0x50] sm:$0xff]
        %v336 = vld [vmem:[%s271 + $0x58] sm:$0xff]
        %v337 = vld [vmem:[%s271 + $0x60] sm:$0xff]
        %v338 = vld [vmem:[%s271 + $0x68] sm:$0xff]
        %v339 = vld [vmem:[%s271 + $0x70] sm:$0xff]
        %v340 = vld [vmem:[%s271 + $0x78] sm:$0xff]
        %v341 = vld [vmem:[#allocation2] sm:$0xff]
        %v342 = vld [vmem:[#allocation2 + $0x8] sm:$0xff]
        %343 = vmatprep.subr.mxu0 0.0
        %344 = vmatpush1.xpose.msra.mxu0 %v325
        %345 = vmatprep.subr.mxu0 0.0
        %346 = vmatpush1.xpose.msra.mxu0 %v326
        %347 = vmatprep.subr.mxu0 0.0
        %348 = vmatpush1.xpose.msra.mxu0 %v327
        %349 = vmatprep.subr.mxu0 0.0
        %350 = vmatpush1.xpose.msra.mxu0 %v328
        %351 = vmatprep.subr.mxu0 0.0
        %352 = vmatpush1.xpose.msra.mxu0 %v329
        %353 = vmatprep.subr.mxu0 0.0
        %354 = vmatpush1.xpose.msra.mxu0 %v330
        %355 = vmatprep.subr.mxu0 0.0
        %356 = vmatpush1.xpose.msra.mxu0 %v331
        %357 = vmatprep.subr.mxu0 0.0
        %358 = vmatpush1.xpose.msra.mxu0 %v332
        %359 = vmatprep.subr.mxu0 0.0
        %360 = vmatpush1.xpose.msra.mxu0 %v333
        %361 = vmatprep.subr.mxu0 0.0
        %362 = vmatpush1.xpose.msra.mxu0 %v334
        %363 = vmatprep.subr.mxu0 0.0
        %364 = vmatpush1.xpose.msra.mxu0 %v335
        %365 = vmatprep.subr.mxu0 0.0
        %366 = vmatpush1.xpose.msra.mxu0 %v336
        %367 = vmatprep.subr.mxu0 0.0
        %368 = vmatpush1.xpose.msra.mxu0 %v337
        %369 = vmatprep.subr.mxu0 0.0
        %370 = vmatpush1.xpose.msra.mxu0 %v338
        %371 = vmatprep.subr.mxu0 0.0
        %372 = vmatpush1.xpose.msra.mxu0 %v339
        %373 = vmatprep.subr.mxu0 0.0
        %374 = vmatpush1.xpose.msra.mxu0 %v340
        %375 = vmatprep.subr.mxu0 0.0
        %376 = vmatpush1.xpose.msra.mxu0 0.0
        %377 = vmatprep.subr.mxu0 0.0
        %378 = vmatpush1.xpose.msra.mxu0 0.0
        %379 = vmatprep.subr.mxu0 0.0
        %380 = vmatpush1.xpose.msra.mxu0 0.0
        %381 = vmatprep.subr.mxu0 0.0
        %382 = vmatpush1.xpose.msra.mxu0 0.0
        %383 = vmatprep.subr.mxu0 0.0
        %384 = vmatpush1.xpose.msra.mxu0 0.0
        %385 = vmatprep.subr.mxu0 0.0
        %386 = vmatpush1.xpose.msra.mxu0 0.0
        %387 = vmatprep.subr.mxu0 0.0
        %388 = vmatpush1.xpose.msra.mxu0 0.0
        %389 = vmatprep.subr.mxu0 0.0
        %390 = vmatpush1.xpose.msra.mxu0 0.0
        %391 = vmatprep.subr.mxu0 0.0
        %392 = vmatpush1.xpose.msra.mxu0 0.0
        %393 = vmatprep.subr.mxu0 0.0
        %394 = vmatpush1.xpose.msra.mxu0 0.0
        %395 = vmatprep.subr.mxu0 0.0
        %396 = vmatpush1.xpose.msra.mxu0 0.0
        %397 = vmatprep.subr.mxu0 0.0
        %398 = vmatpush1.xpose.msra.mxu0 0.0
        %399 = vmatprep.subr.mxu0 0.0
        %400 = vmatpush1.xpose.msra.mxu0 0.0
        %401 = vmatprep.subr.mxu0 0.0
        %402 = vmatpush1.xpose.msra.mxu0 0.0
        %403 = vmatprep.subr.mxu0 0.0
        %404 = vmatpush1.xpose.msra.mxu0 0.0
        %405 = vmatprep.subr.mxu0 0.0
        %406 = vmatpush1.xpose.msra.mxu0 0.0
        %407 = vmatprep.mubr.f32.mxu0 0.0
        %408 = vmatmul.mubr.f32.gmra.mrb[0].mxu0 %v323
        %v409 = vpop.f32.mrb[0].mxu0
        %v410 = vadd.f32 0.0, %v409
        %v411 = vpop.f32.mrb[0].mxu0
        %412 = vmatprep.mubr.f32.mxu0 0.0
        %413 = vmatmul.mubr.f32.gmra.mrb[0].mxu0 %v324
        %v414 = vpop.f32.mrb[0].mxu0
        %v415 = vadd.f32 0.0, %v414
        %v416 = vpop.f32.mrb[0].mxu0
        %417 = vdwg.mxu0
        %v418 = vadd.f32 %v341, %v410
        %v419 = vadd.f32 %v342, %v415
        %420 = vst [vmem:[#allocation2] sm:$0xff] %v418
        %421 = vst [vmem:[#allocation2 + $0x8] sm:$0xff] %v419
        %v422 = vld [vmem:[#allocation3] sm:$0xff]
        %v423 = vmul.f32 %v325, %v325
        %v424 = vmul.f32 %v326, %v326
        %v425 = vmul.f32 %v327, %v327
        %v426 = vmul.f32 %v328, %v328
        %v427 = vmul.f32 %v329, %v329
        %v428 = vmul.f32 %v330, %v330
        %v429 = vmul.f32 %v331, %v331
        %v430 = vmul.f32 %v332, %v332
        %v431 = vmul.f32 %v333, %v333
        %v432 = vmul.f32 %v334, %v334
        %v433 = vmul.f32 %v335, %v335
        %v434 = vmul.f32 %v336, %v336
        %v435 = vmul.f32 %v337, %v337
        %v436 = vmul.f32 %v338, %v338
        %v437 = vmul.f32 %v339, %v339
        %v438 = vmul.f32 %v340, %v340
        %439 = vmatprep.subr.mxu0 0.0
        %440 = vmatpush1.xpose.msra.mxu0 %v423
        %441 = vmatprep.subr.mxu0 0.0
        %442 = vmatpush1.xpose.msra.mxu0 %v424
        %443 = vmatprep.subr.mxu0 0.0
        %444 = vmatpush1.xpose.msra.mxu0 %v425
        %445 = vmatprep.subr.mxu0 0.0
        %446 = vmatpush1.xpose.msra.mxu0 %v426
        %447 = vmatprep.subr.mxu0 0.0
        %448 = vmatpush1.xpose.msra.mxu0 %v427
        %449 = vmatprep.subr.mxu0 0.0
        %450 = vmatpush1.xpose.msra.mxu0 %v428
        %451 = vmatprep.subr.mxu0 0.0
        %452 = vmatpush1.xpose.msra.mxu0 %v429
        %453 = vmatprep.subr.mxu0 0.0
        %454 = vmatpush1.xpose.msra.mxu0 %v430
        %455 = vmatprep.subr.mxu0 0.0
        %456 = vmatpush1.xpose.msra.mxu0 %v431
        %457 = vmatprep.subr.mxu0 0.0
        %458 = vmatpush1.xpose.msra.mxu0 %v432
        %459 = vmatprep.subr.mxu0 0.0
        %460 = vmatpush1.xpose.msra.mxu0 %v433
        %461 = vmatprep.subr.mxu0 0.0
        %462 = vmatpush1.xpose.msra.mxu0 %v434
        %463 = vmatprep.subr.mxu0 0.0
        %464 = vmatpush1.xpose.msra.mxu0 %v435
        %465 = vmatprep.subr.mxu0 0.0
        %466 = vmatpush1.xpose.msra.mxu0 %v436
        %467 = vmatprep.subr.mxu0 0.0
        %468 = vmatpush1.xpose.msra.mxu0 %v437
        %469 = vmatprep.subr.mxu0 0.0
        %470 = vmatpush1.xpose.msra.mxu0 %v438
        %471 = vmatprep.subr.mxu0 0.0
        %472 = vmatpush1.xpose.msra.mxu0 0.0
        %473 = vmatprep.subr.mxu0 0.0
        %474 = vmatpush1.xpose.msra.mxu0 0.0
        %475 = vmatprep.subr.mxu0 0.0
        %476 = vmatpush1.xpose.msra.mxu0 0.0
        %477 = vmatprep.subr.mxu0 0.0
        %478 = vmatpush1.xpose.msra.mxu0 0.0
        %479 = vmatprep.subr.mxu0 0.0
        %480 = vmatpush1.xpose.msra.mxu0 0.0
        %481 = vmatprep.subr.mxu0 0.0
        %482 = vmatpush1.xpose.msra.mxu0 0.0
        %483 = vmatprep.subr.mxu0 0.0
        %484 = vmatpush1.xpose.msra.mxu0 0.0
        %485 = vmatprep.subr.mxu0 0.0
        %486 = vmatpush1.xpose.msra.mxu0 0.0
        %487 = vmatprep.subr.mxu0 0.0
        %488 = vmatpush1.xpose.msra.mxu0 0.0
        %489 = vmatprep.subr.mxu0 0.0
        %490 = vmatpush1.xpose.msra.mxu0 0.0
        %491 = vmatprep.subr.mxu0 0.0
        %492 = vmatpush1.xpose.msra.mxu0 0.0
        %493 = vmatprep.subr.mxu0 0.0
        %494 = vmatpush1.xpose.msra.mxu0 0.0
        %495 = vmatprep.subr.mxu0 0.0
        %496 = vmatpush1.xpose.msra.mxu0 0.0
        %497 = vmatprep.subr.mxu0 0.0
        %498 = vmatpush1.xpose.msra.mxu0 0.0
        %499 = vmatprep.subr.mxu0 0.0
        %500 = vmatpush1.xpose.msra.mxu0 0.0
        %501 = vmatprep.subr.mxu0 0.0
        %502 = vmatpush1.xpose.msra.mxu0 0.0
        %503 = vmatprep.mubr.f32.mxu0 0.0
        %504 = vmatmul.mubr.f32.gmra.mrb[0].mxu0 1.0
        %v505 = vpop.f32.mrb[0].mxu0
        %v506 = vadd.f32 0.0, %v505
        %v507 = vpop.f32.mrb[0].mxu0
        %508 = vdwg.mxu0
        %v509 = vadd.f32 %v422, %v506
        %510 = vst [vmem:[#allocation3] sm:$0xff] %v509
        %p511 = scmp.eq.s32.totalorder %s31, 2
        // Predicated region
        $region49: #{tpu_custom_call.1} parent=35 // pred_check
          %p512 = pneg %p511
        $region50: #{tpu_custom_call.1} parent=35 // pred_check_branch
          %514 = sbr.rel (%p512) target = $region52
        $region51: #{tpu_custom_call.1} parent=35 // pred_region
          %v515 = vld [vmem:[#allocation3] sm:$0x1]
          %v516 = vrsqrt.pop %v515
          %v517 = vld [vmem:[%s311] sm:$0x1]
          %v518 = vmul.f32 %v517, %v516
          %v519 = vld [vmem:[#allocation2] sm:$0xff]
          %v520 = vld [vmem:[#allocation2 + $0x8] sm:$0xff]
          %v522 = vlaneseq
          %v523 = vshrl.u32 %v522, 7
          %v524 = vsub.s32 0, %v523
          %v525 = vrot.slane %v518, %v524
          %v527 = vmul.f32 %v519, %v525
          %v528 = vmul.f32 %v520, %v525
          %v529 = vld [vmem:[%s314] sm:$0x1]
          %v531 = vlaneseq
          %v532 = vshrl.u32 %v531, 7
          %v533 = vsub.s32 0, %v532
          %v534 = vrot.slane %v529, %v533
          %v536 = vadd.f32 %v527, %v534
          %v537 = vadd.f32 %v528, %v534
          %538 = vst [vmem:[%s306] sm:$0xff] %v536
          %539 = vst [vmem:[%s306 + $0x8] sm:$0xff] %v537
        $region52: #{tpu_custom_call.1} parent=35 // pred_fallthru
          _
        %s540 = sand.u32 %s161, 1
        %s541 = scalar_lea.sflag [#allocation6], %s540
        %s542 = sand.u32 %s161, 1
        %s543 = smul.addr %s542, 16
        %s544 = scalar_lea.vmem [#allocation9], %s543
        // Predicated region
        $region53: #{tpu_custom_call.1} parent=35 // pred_check
          %p545 = pneg %p171
        $region54: #{tpu_custom_call.1} parent=35 // pred_check_branch
          %547 = sbr.rel (%p545) target = $region56
        $region55: #{tpu_custom_call.1} parent=35 // pred_region
          %s548 = smul.u32 2, %s29
          %s550 = ssub.s32 256, 256
          %551 = vsyncadd %s541, %s550
          %s552 = smul.addr %s548, 2
          %s553 = sadd.s32 %s30, %s552
          %s554 = smul.addr %s553, 128
          %s555 = scalar_lea.hbm %s4, %s554
          %s556 = sshll.u32 %s544, 4
          %s557 = int_to_ptr.vmem [resolvable:$true] %s556
          %562 = dma.vmem_to_hbm [thread:$0]  %s557, 256, %s555, %s541, 128, 256, 8
        $region56: #{tpu_custom_call.1} parent=35 // pred_fallthru
          _
      $region36: #{tpu_custom_call.1} parent=5 // pred_fallthru
        _
      %p563 = scmp.le.s32.totalorder 2, %s19
      // Predicated region
      $region57: #{tpu_custom_call.1} parent=5 // pred_check
        %p564 = pneg %p563
      $region58: #{tpu_custom_call.1} parent=5 // pred_check_branch
        %566 = sbr.rel (%p564) target = $region60
      $region59: #{tpu_custom_call.1} parent=5 // pred_region
        %s567 = ssub.s32 %s19, 2
        // Predicated region
        $region61: #{tpu_custom_call.1} parent=59 // pred_check
          %p568 = pneg %p177
        $region62: #{tpu_custom_call.1} parent=59 // pred_check_branch
          %570 = sbr.rel (%p568) target = $region64
        $region63: #{tpu_custom_call.1} parent=59 // pred_region
          %s571 = sand.u32 %s162, 1
          %s572 = scalar_lea.sflag [#allocation6], %s571
          %s573 = sand.u32 %s162, 1
          %s574 = smul.addr %s573, 16
          %s575 = scalar_lea.vmem [#allocation9], %s574
          %576 = dma.done %s572, 256
        $region64: #{tpu_custom_call.1} parent=59 // pred_fallthru
          _
      $region60: #{tpu_custom_call.1} parent=5 // pred_fallthru
        _
    $region6: #{tpu_custom_call.1} parent=1 // loop_footer
      %s23 = sadd.s32 1, %s19
    $region7: #{tpu_custom_call.1} parent=1 // loop_footer_branch
      %18 = sbr.rel target = $region3
    $region8: #{tpu_custom_call.1} parent=1 // loop_exit
      _
    %577 = vsyncpa [#allocation5], 1
    %s578 = scalar_lea.sflag [#allocation5], 1
    %579 = vsyncpa %s578, 1
    %580 = vsyncpa [#allocation8], 1
    %s581 = scalar_lea.sflag [#allocation8], 1
    %582 = vsyncpa %s581, 1
    %583 = vsyncpa [#allocation6], 1
    %s584 = scalar_lea.sflag [#allocation6], 1
    %585 = vsyncpa %s584, 1

</llo_original>
